<compile_context>
chip_gen: v7x
topology: tpu7x:2x2x1
jax: 0.10.0
libtpu: 0.0.40
codegen_flags: <defaults>
</compile_context>

<pallas_src>
import functools

import jax
import jax.numpy as jnp
from jax.experimental import pallas as pl
from jax.experimental.pallas import tpu as pltpu


# --------------------------- static packing layout ---------------------------
# w_small : (392, 128) bf16
#   rows   0: 32 , cols 0:  8  -> embedding block (type weights + type biases)
#   rows  32: 40 , cols 0: 32  -> gcn1 weight (8   -> 32 )
#   rows  40: 72 , cols 0: 64  -> gcn2 weight (32  -> 64 )
#   rows  72:136 , cols 0:128  -> gcn3 weight (64  -> 128)
#   rows 136:392 , cols 0:128  -> l3   weight (256 -> action_dim, lane padded)
# w_big   : (384, 256) bf16
#   rows   0:128 -> l1 weight (128 -> 256)
#   rows 128:384 -> l2 weight (256 -> 256)
# biases  : (8, 256) f32 ; row 0..5 = gcn1, gcn2, gcn3, l1, l2, l3 (zero padded)
N_PAD_MULT = 32
B_PAD_MULT = 8
D_IN_PAD = 32          # 21 raw feature cols + 4 one-hot type cols, padded to 32


# ------------------------------ Pallas kernel --------------------------------
def actor_kernel(max_action,
                 x_ref, a_hat_ref, pool_ref,
                 w_small_ref, w_big_ref, bias_ref,
                 out_ref):
    f32, bf16 = jnp.float32, jnp.bfloat16

    x = x_ref[...]            # (N_pad, 32)  bf16
    a_hat = a_hat_ref[...]    # (N_pad, N_pad) bf16

    # node-type embeddings: per-type Linear + bias folded into one block matmul
    emb = jnp.dot(x, w_small_ref[0:32, 0:8], preferred_element_type=f32)

    def gcn(h, w, brow, width):
        h = jnp.dot(h.astype(bf16), w, preferred_element_type=f32)          # H @ W
        h = jnp.dot(a_hat, h.astype(bf16), preferred_element_type=f32)      # A_hat @ .
        return jnp.maximum(h + bias_ref[brow:brow + 1, 0:width], 0.0)

    h = gcn(emb, w_small_ref[32:40, 0:32], 0, 32)       # GCNConv 1 + ReLU
    h = gcn(h, w_small_ref[40:72, 0:64], 1, 64)         # GCNConv 2 + ReLU
    h = gcn(h, w_small_ref[72:136, 0:128], 2, 128)      # GCNConv 3 + ReLU

    # global_mean_pool: (B_pad, N_pad) @ (N_pad, 128)
    pooled = jnp.dot(pool_ref[...], h.astype(bf16), preferred_element_type=f32)

    # actor MLP
    a = jnp.maximum(jnp.dot(pooled.astype(bf16), w_big_ref[0:128, :],
                            preferred_element_type=f32) + bias_ref[3:4, :], 0.0)
    a = jnp.maximum(jnp.dot(a.astype(bf16), w_big_ref[128:384, :],
                            preferred_element_type=f32) + bias_ref[4:5, :], 0.0)
    logits = jnp.dot(a.astype(bf16), w_small_ref[136:392, 0:128],
                     preferred_element_type=f32) + bias_ref[5:6, 0:128]

    # lane-dense (B_pad, 128) store; padded lanes are exactly 0 (tanh(0)=0)
    out_ref[...] = max_action * jnp.tanh(logits)


def actor_forward(x_in, a_hat, pool, w_small, w_big, biases,
                  max_action, num_graphs, action_dim):
    b_pad = pool.shape[0]
    vmem = pl.BlockSpec(memory_space=pltpu.MemorySpace.VMEM)
    out = pl.pallas_call(
        functools.partial(actor_kernel, float(max_action)),
        out_shape=jax.ShapeDtypeStruct((b_pad, 128), jnp.float32),
        in_specs=[vmem] * 6,
        out_specs=vmem,
    )(x_in, a_hat, pool, w_small, w_big, biases)
    return out[:num_graphs, :action_dim]


# ------------------------------ plain-JAX glue --------------------------------
def build_node_inputs(feats, indexes, n_pad):
    """Raw features scattered into type column-blocks + one-hot type columns
    (the one-hot picks up the per-type embedding bias row of w_small)."""
    d_feat = sum(f.shape[1] for f in feats)
    assert d_feat + len(feats) <= D_IN_PAD
    x = jnp.zeros((n_pad, D_IN_PAD), jnp.float32)
    off = 0
    for t, (f, idx) in enumerate(zip(feats, indexes)):
        d = f.shape[1]
        x = x.at[idx, off:off + d].set(f)
        x = x.at[idx, d_feat + t].set(1.0)
        off += d
    return x.astype(jnp.bfloat16)


def build_dense_graph_ops(edge_index, num_nodes, n_pad, sample_node_length, b_pad):
    """Dense normalized adjacency (padded to n_pad) and mean-pool matrix."""
    src, dst = edge_index[0], edge_index[1]
    adj = jnp.zeros((n_pad, n_pad), jnp.float32).at[dst, src].add(1.0)
    adj = adj + jnp.diag((jnp.arange(n_pad) < num_nodes).astype(jnp.float32))
    deg = adj.sum(axis=1)
    dinv = jnp.where(deg > 0, 1.0 / jnp.sqrt(deg), 0.0)
    a_hat = dinv[:, None] * adj * dinv[None, :]          # D^-1/2 (A+I) D^-1/2

    num_graphs = len(sample_node_length)
    batch = jnp.concatenate([jnp.full((l,), g, jnp.int32)
                             for g, l in enumerate(sample_node_length)])
    onehot = (batch[None, :] == jnp.arange(num_graphs)[:, None]).astype(jnp.float32)
    pool = onehot / onehot.sum(axis=1, keepdims=True)
    pool_pad = jnp.zeros((b_pad, n_pad), jnp.float32)
    pool_pad = pool_pad.at[:num_graphs, :num_nodes].set(pool)
    return a_hat.astype(jnp.bfloat16), pool_pad.astype(jnp.bfloat16)


def pack_actor_params(w_types, b_types, wg, bg, wl, bl, feature_dim):
    """Pack all parameters into w_small (bf16), w_big (bf16), biases (f32)."""
    assert wg[0].shape == (feature_dim, 32) and wg[1].shape == (32, 64)
    assert wg[2].shape == (64, 128)
    assert wl[0].shape == (128, 256) and wl[1].shape == (256, 256)
    assert wl[2].shape[0] == 256 and wl[2].shape[1] <= 128

    emb_block = jnp.concatenate(list(w_types) + [jnp.stack(b_types, 0)], axis=0)
    n_emb_rows = emb_block.shape[0]                        # 21 + 4 = 25

    w_small = jnp.zeros((392, 128), jnp.float32)
    w_small = w_small.at[0:n_emb_rows, 0:feature_dim].set(emb_block)
    w_small = w_small.at[32:40, 0:32].set(wg[0])
    w_small = w_small.at[40:72, 0:64].set(wg[1])
    w_small = w_small.at[72:136, 0:128].set(wg[2])
    w_small = w_small.at[136:392, 0:wl[2].shape[1]].set(wl[2])

    w_big = jnp.zeros((384, 256), jnp.float32)
    w_big = w_big.at[0:128, :].set(wl[0])
    w_big = w_big.at[128:384, :].set(wl[1])

    biases = jnp.zeros((8, 256), jnp.float32)
    biases = biases.at[0, 0:32].set(bg[0])
    biases = biases.at[1, 0:64].set(bg[1])
    biases = biases.at[2, 0:128].set(bg[2])
    biases = biases.at[3, 0:256].set(bl[0])
    biases = biases.at[4, 0:256].set(bl[1])
    biases = biases.at[5, 0:bl[2].shape[0]].set(bl[2])

    return w_small.astype(jnp.bfloat16), w_big.astype(jnp.bfloat16), biases


# ----------------------------------- main --------------------------------------
if __name__ == "__main__":
    key = jax.random.PRNGKey(0)

    # problem sizes (module defaults: fx_dim=8, GNN_hidden=32, mlp_hidden=256)
    fx_node_sizes = {"ev": 5, "cs": 6, "tr": 7, "env": 3}
    feature_dim = 8
    gnn_hidden = 32
    state_dim = 4 * gnn_hidden          # 128
    mlp_hidden = 256
    action_dim = 4
    max_action = 2.0

    num_graphs = 2
    n_ev_g, n_cs_g, n_tr_g, n_env_g = 4, 3, 2, 1
    nodes_per_graph = n_ev_g + n_cs_g + n_tr_g + n_env_g        # 10
    num_nodes = num_graphs * nodes_per_graph                    # 20
    sample_node_length = [nodes_per_graph] * num_graphs

    n_pad = ((num_nodes + N_PAD_MULT - 1) // N_PAD_MULT) * N_PAD_MULT   # 32
    b_pad = ((num_graphs + B_PAD_MULT - 1) // B_PAD_MULT) * B_PAD_MULT  # 8

    # ----- deterministic raw graph inputs -----
    ks = jax.random.split(key, 20)
    ev_features = jax.random.normal(ks[0], (num_graphs * n_ev_g, fx_node_sizes["ev"]), jnp.float32)
    cs_features = jax.random.normal(ks[1], (num_graphs * n_cs_g, fx_node_sizes["cs"]), jnp.float32)
    tr_features = jax.random.normal(ks[2], (num_graphs * n_tr_g, fx_node_sizes["tr"]), jnp.float32)
    env_features = jax.random.normal(ks[3], (num_graphs * n_env_g, fx_node_sizes["env"]), jnp.float32)

    ev_idx, cs_idx, tr_idx, env_idx, edges = [], [], [], [], []
    for g in range(num_graphs):
        base = g * nodes_per_graph
        ev_idx += list(range(base + 0, base + 4))
        cs_idx += list(range(base + 4, base + 7))
        tr_idx += list(range(base + 7, base + 9))
        env_idx += [base + 9]
        env_node = base + 9
        for i in range(nodes_per_graph - 1):        # bidirectional star graph
            edges.append((base + i, env_node))
            edges.append((env_node, base + i))
    edge_index = jnp.asarray(edges, jnp.int32).T
    ev_idx = jnp.asarray(ev_idx, jnp.int32)
    cs_idx = jnp.asarray(cs_idx, jnp.int32)
    tr_idx = jnp.asarray(tr_idx, jnp.int32)
    env_idx = jnp.asarray(env_idx, jnp.int32)

    # ----- deterministic parameters (synthetic init) -----
    def init_w(k, shape, scale=0.1):
        return scale * jax.random.normal(k, shape, jnp.float32)

    w_ev = init_w(ks[4], (fx_node_sizes["ev"], feature_dim))
    w_cs = init_w(ks[5], (fx_node_sizes["cs"], feature_dim))
    w_tr = init_w(ks[6], (fx_node_sizes["tr"], feature_dim))
    w_env = init_w(ks[7], (fx_node_sizes["env"], feature_dim))
    b_ev = init_w(ks[8], (feature_dim,), 0.05)
    b_cs = init_w(ks[9], (feature_dim,), 0.05)
    b_tr = init_w(ks[10], (feature_dim,), 0.05)
    b_env = init_w(ks[11], (feature_dim,), 0.05)

    wg1 = init_w(ks[12], (feature_dim, gnn_hidden))
    wg2 = init_w(ks[13], (gnn_hidden, 2 * gnn_hidden))
    wg3 = init_w(ks[14], (2 * gnn_hidden, 4 * gnn_hidden))
    bg1 = jnp.zeros((gnn_hidden,), jnp.float32)
    bg2 = jnp.zeros((2 * gnn_hidden,), jnp.float32)
    bg3 = jnp.zeros((4 * gnn_hidden,), jnp.float32)

    wl1 = init_w(ks[15], (state_dim, mlp_hidden))
    wl2 = init_w(ks[16], (mlp_hidden, mlp_hidden))
    wl3 = init_w(ks[17], (mlp_hidden, action_dim))
    bl1 = init_w(ks[18], (mlp_hidden,), 0.05)
    bl2 = init_w(ks[19], (mlp_hidden,), 0.05)
    bl3 = jnp.zeros((action_dim,), jnp.float32)

    # ----- glue: densify scatter / adjacency / pooling, pack params -----
    x_in = build_node_inputs(
        feats=[ev_features, cs_features, tr_features, env_features],
        indexes=[ev_idx, cs_idx, tr_idx, env_idx],
        n_pad=n_pad)
    a_hat, pool = build_dense_graph_ops(edge_index, num_nodes, n_pad,
                                        sample_node_length, b_pad)
    w_small, w_big, biases = pack_actor_params(
        w_types=[w_ev, w_cs, w_tr, w_env], b_types=[b_ev, b_cs, b_tr, b_env],
        wg=[wg1, wg2, wg3], bg=[bg1, bg2, bg3],
        wl=[wl1, wl2, wl3], bl=[bl1, bl2, bl3],
        feature_dim=feature_dim)

    # ----- run the fused Pallas kernel -----
    actions = actor_forward(x_in, a_hat, pool, w_small, w_big, biases,
                            max_action, num_graphs, action_dim)
    actions = jax.block_until_ready(actions)

    assert actions.shape == (num_graphs, action_dim)
    assert bool(jnp.all(jnp.abs(actions) <= max_action + 1e-5))
    print("KERNEL_OK")
</pallas_src>

<mosaic_0001>
module attributes {stable_mosaic.version = 11 : i64} {
  func.func @actor_kernel(%arg0: memref<32x32xbf16, #tpu.memory_space<vmem>>, %arg1: memref<32x32xbf16, #tpu.memory_space<vmem>>, %arg2: memref<8x32xbf16, #tpu.memory_space<vmem>>, %arg3: memref<392x128xbf16, #tpu.memory_space<vmem>>, %arg4: memref<384x256xbf16, #tpu.memory_space<vmem>>, %arg5: memref<8x256xf32, #tpu.memory_space<vmem>>, %arg6: memref<8x128xf32, #tpu.memory_space<vmem>>) attributes {dimension_semantics = [], scalar_prefetch = 0 : i64, scratch_operands = 0 : i64, tpu.core_type = #tpu.core_type<tc>} {
    %c0 = arith.constant 0 : index
    %c0_0 = arith.constant 0 : index
    %0 = vector.load %arg0[%c0, %c0_0] : memref<32x32xbf16, #tpu.memory_space<vmem>>, vector<32x32xbf16>
    %c0_1 = arith.constant 0 : index
    %c0_2 = arith.constant 0 : index
    %1 = vector.load %arg1[%c0_1, %c0_2] : memref<32x32xbf16, #tpu.memory_space<vmem>>, vector<32x32xbf16>
    %c0_3 = arith.constant 0 : index
    %c0_4 = arith.constant 0 : index
    %2 = vector.load %arg3[%c0_3, %c0_4] : memref<392x128xbf16, #tpu.memory_space<vmem>>, vector<32x8xbf16>
    %cst = arith.constant dense<0.000000e+00> : vector<32x8xf32>
    %3 = tpu.matmul %0, %2, %cst {dimension_numbers = #tpu.dot_dimension_numbers<[1], [0], [0], [1], [0, 0, 1, 1], [], []>} : vector<32x32xbf16>, vector<32x8xbf16>, vector<32x8xf32> -> vector<32x8xf32>
    %c32 = arith.constant 32 : index
    %c0_5 = arith.constant 0 : index
    %4 = vector.load %arg3[%c32, %c0_5] : memref<392x128xbf16, #tpu.memory_space<vmem>>, vector<8x32xbf16>
    %5 = arith.truncf %3 : vector<32x8xf32> to vector<32x8xbf16>
    %cst_6 = arith.constant dense<0.000000e+00> : vector<32x32xf32>
    %6 = tpu.matmul %5, %4, %cst_6 {dimension_numbers = #tpu.dot_dimension_numbers<[1], [0], [0], [1], [0, 0, 1, 1], [], []>} : vector<32x8xbf16>, vector<8x32xbf16>, vector<32x32xf32> -> vector<32x32xf32>
    %7 = arith.truncf %6 : vector<32x32xf32> to vector<32x32xbf16>
    %cst_7 = arith.constant dense<0.000000e+00> : vector<32x32xf32>
    %8 = tpu.matmul %1, %7, %cst_7 {dimension_numbers = #tpu.dot_dimension_numbers<[1], [0], [0], [1], [0, 0, 1, 1], [], []>} : vector<32x32xbf16>, vector<32x32xbf16>, vector<32x32xf32> -> vector<32x32xf32>
    %c0_8 = arith.constant 0 : index
    %c0_9 = arith.constant 0 : index
    %9 = vector.load %arg5[%c0_8, %c0_9] : memref<8x256xf32, #tpu.memory_space<vmem>>, vector<1x32xf32>
    %10 = vector.broadcast %9 : vector<1x32xf32> to vector<32x32xf32>
    %11 = arith.addf %8, %10 : vector<32x32xf32>
    %cst_10 = arith.constant 0.000000e+00 : f32
    %12 = vector.broadcast %cst_10 : f32 to vector<32x32xf32>
    %13 = arith.maximumf %11, %12 : vector<32x32xf32>
    %c40 = arith.constant 40 : index
    %c0_11 = arith.constant 0 : index
    %14 = vector.load %arg3[%c40, %c0_11] : memref<392x128xbf16, #tpu.memory_space<vmem>>, vector<32x64xbf16>
    %15 = arith.truncf %13 : vector<32x32xf32> to vector<32x32xbf16>
    %cst_12 = arith.constant dense<0.000000e+00> : vector<32x64xf32>
    %16 = tpu.matmul %15, %14, %cst_12 {dimension_numbers = #tpu.dot_dimension_numbers<[1], [0], [0], [1], [0, 0, 1, 1], [], []>} : vector<32x32xbf16>, vector<32x64xbf16>, vector<32x64xf32> -> vector<32x64xf32>
    %17 = arith.truncf %16 : vector<32x64xf32> to vector<32x64xbf16>
    %cst_13 = arith.constant dense<0.000000e+00> : vector<32x64xf32>
    %18 = tpu.matmul %1, %17, %cst_13 {dimension_numbers = #tpu.dot_dimension_numbers<[1], [0], [0], [1], [0, 0, 1, 1], [], []>} : vector<32x32xbf16>, vector<32x64xbf16>, vector<32x64xf32> -> vector<32x64xf32>
    %c1 = arith.constant 1 : index
    %c0_14 = arith.constant 0 : index
    %19 = vector.load %arg5[%c1, %c0_14] : memref<8x256xf32, #tpu.memory_space<vmem>>, vector<1x64xf32>
    %20 = vector.broadcast %19 : vector<1x64xf32> to vector<32x64xf32>
    %21 = arith.addf %18, %20 : vector<32x64xf32>
    %cst_15 = arith.constant 0.000000e+00 : f32
    %22 = vector.broadcast %cst_15 : f32 to vector<32x64xf32>
    %23 = arith.maximumf %21, %22 : vector<32x64xf32>
    %c72 = arith.constant 72 : index
    %c0_16 = arith.constant 0 : index
    %24 = vector.load %arg3[%c72, %c0_16] : memref<392x128xbf16, #tpu.memory_space<vmem>>, vector<64x128xbf16>
    %25 = arith.truncf %23 : vector<32x64xf32> to vector<32x64xbf16>
    %cst_17 = arith.constant dense<0.000000e+00> : vector<32x128xf32>
    %26 = tpu.matmul %25, %24, %cst_17 {dimension_numbers = #tpu.dot_dimension_numbers<[1], [0], [0], [1], [0, 0, 1, 1], [], []>} : vector<32x64xbf16>, vector<64x128xbf16>, vector<32x128xf32> -> vector<32x128xf32>
    %27 = arith.truncf %26 : vector<32x128xf32> to vector<32x128xbf16>
    %cst_18 = arith.constant dense<0.000000e+00> : vector<32x128xf32>
    %28 = tpu.matmul %1, %27, %cst_18 {dimension_numbers = #tpu.dot_dimension_numbers<[1], [0], [0], [1], [0, 0, 1, 1], [], []>} : vector<32x32xbf16>, vector<32x128xbf16>, vector<32x128xf32> -> vector<32x128xf32>
    %c2 = arith.constant 2 : index
    %c0_19 = arith.constant 0 : index
    %29 = vector.load %arg5[%c2, %c0_19] : memref<8x256xf32, #tpu.memory_space<vmem>>, vector<1x128xf32>
    %30 = vector.broadcast %29 : vector<1x128xf32> to vector<32x128xf32>
    %31 = arith.addf %28, %30 : vector<32x128xf32>
    %cst_20 = arith.constant 0.000000e+00 : f32
    %32 = vector.broadcast %cst_20 : f32 to vector<32x128xf32>
    %33 = arith.maximumf %31, %32 : vector<32x128xf32>
    %c0_21 = arith.constant 0 : index
    %c0_22 = arith.constant 0 : index
    %34 = vector.load %arg2[%c0_21, %c0_22] : memref<8x32xbf16, #tpu.memory_space<vmem>>, vector<8x32xbf16>
    %35 = arith.truncf %33 : vector<32x128xf32> to vector<32x128xbf16>
    %cst_23 = arith.constant dense<0.000000e+00> : vector<8x128xf32>
    %36 = tpu.matmul %34, %35, %cst_23 {dimension_numbers = #tpu.dot_dimension_numbers<[1], [0], [0], [1], [0, 0, 1, 1], [], []>} : vector<8x32xbf16>, vector<32x128xbf16>, vector<8x128xf32> -> vector<8x128xf32>
    %37 = arith.truncf %36 : vector<8x128xf32> to vector<8x128xbf16>
    %c0_24 = arith.constant 0 : index
    %c0_25 = arith.constant 0 : index
    %38 = vector.load %arg4[%c0_24, %c0_25] : memref<384x256xbf16, #tpu.memory_space<vmem>>, vector<128x256xbf16>
    %cst_26 = arith.constant dense<0.000000e+00> : vector<8x256xf32>
    %39 = tpu.matmul %37, %38, %cst_26 {dimension_numbers = #tpu.dot_dimension_numbers<[1], [0], [0], [1], [0, 0, 1, 1], [], []>} : vector<8x128xbf16>, vector<128x256xbf16>, vector<8x256xf32> -> vector<8x256xf32>
    %c3 = arith.constant 3 : index
    %c0_27 = arith.constant 0 : index
    %40 = vector.load %arg5[%c3, %c0_27] : memref<8x256xf32, #tpu.memory_space<vmem>>, vector<1x256xf32>
    %41 = vector.broadcast %40 : vector<1x256xf32> to vector<8x256xf32>
    %42 = arith.addf %39, %41 : vector<8x256xf32>
    %cst_28 = arith.constant 0.000000e+00 : f32
    %43 = vector.broadcast %cst_28 : f32 to vector<8x256xf32>
    %44 = arith.maximumf %42, %43 : vector<8x256xf32>
    %45 = arith.truncf %44 : vector<8x256xf32> to vector<8x256xbf16>
    %c128 = arith.constant 128 : index
    %c0_29 = arith.constant 0 : index
    %46 = vector.load %arg4[%c128, %c0_29] : memref<384x256xbf16, #tpu.memory_space<vmem>>, vector<256x256xbf16>
    %cst_30 = arith.constant dense<0.000000e+00> : vector<8x256xf32>
    %47 = tpu.matmul %45, %46, %cst_30 {dimension_numbers = #tpu.dot_dimension_numbers<[1], [0], [0], [1], [0, 0, 1, 1], [], []>} : vector<8x256xbf16>, vector<256x256xbf16>, vector<8x256xf32> -> vector<8x256xf32>
    %c4 = arith.constant 4 : index
    %c0_31 = arith.constant 0 : index
    %48 = vector.load %arg5[%c4, %c0_31] : memref<8x256xf32, #tpu.memory_space<vmem>>, vector<1x256xf32>
    %49 = vector.broadcast %48 : vector<1x256xf32> to vector<8x256xf32>
    %50 = arith.addf %47, %49 : vector<8x256xf32>
    %cst_32 = arith.constant 0.000000e+00 : f32
    %51 = vector.broadcast %cst_32 : f32 to vector<8x256xf32>
    %52 = arith.maximumf %50, %51 : vector<8x256xf32>
    %53 = arith.truncf %52 : vector<8x256xf32> to vector<8x256xbf16>
    %c136 = arith.constant 136 : index
    %c0_33 = arith.constant 0 : index
    %54 = vector.load %arg3[%c136, %c0_33] : memref<392x128xbf16, #tpu.memory_space<vmem>>, vector<256x128xbf16>
    %cst_34 = arith.constant dense<0.000000e+00> : vector<8x128xf32>
    %55 = tpu.matmul %53, %54, %cst_34 {dimension_numbers = #tpu.dot_dimension_numbers<[1], [0], [0], [1], [0, 0, 1, 1], [], []>} : vector<8x256xbf16>, vector<256x128xbf16>, vector<8x128xf32> -> vector<8x128xf32>
    %c5 = arith.constant 5 : index
    %c0_35 = arith.constant 0 : index
    %56 = vector.load %arg5[%c5, %c0_35] : memref<8x256xf32, #tpu.memory_space<vmem>>, vector<1x128xf32>
    %57 = vector.broadcast %56 : vector<1x128xf32> to vector<8x128xf32>
    %58 = arith.addf %55, %57 : vector<8x128xf32>
    %59 = math.tanh %58 : vector<8x128xf32>
    %cst_36 = arith.constant 2.000000e+00 : f32
    %60 = vector.broadcast %cst_36 : f32 to vector<8x128xf32>
    %61 = arith.mulf %60, %59 : vector<8x128xf32>
    %c0_37 = arith.constant 0 : index
    %c0_38 = arith.constant 0 : index
    %62 = vector.load %arg6[%c0_37, %c0_38] : memref<8x128xf32, #tpu.memory_space<vmem>>, vector<8x128xf32>
    tpu.vector_store %arg6[%c0_37, %c0_38], %61 {strides = array<i32>} : memref<8x128xf32, #tpu.memory_space<vmem>>, vector<8x128xf32>,
    return
  }
}

</mosaic_0001>

<llo_original>
// kernel: tpu_custom_call.1
$region0: #{tpu_custom_call.1}
  #allocation0 [shape = 'u32[]', space=smem, size = 0x4, offset = 0x4, fixed_abs, tag = 'smem constant byte address 0x4 - core index']
  #allocation1 [shape = 'u32[144,128]{1,0:T(1,128)}', space=vmem, size = 0x12000, scoped, tag = 'internal scratch']
  %s0 = inlined_call_operand.hbm [shape: bf16[32,32], index: 0, kind: input, shape index: {}]
  %s1 = inlined_call_operand.hbm [shape: bf16[32,32], index: 1, kind: input, shape index: {}]
  %s2 = inlined_call_operand.hbm [shape: bf16[8,32], index: 2, kind: input, shape index: {}]
  %s3 = inlined_call_operand.hbm [shape: bf16[392,128], index: 3, kind: input, shape index: {}]
  %s4 = inlined_call_operand.hbm [shape: bf16[384,256], index: 4, kind: input, shape index: {}]
  %s5 = inlined_call_operand.vmem [shape: f32[8,256], index: 5, kind: input, shape index: {}]
  %s6 = inlined_call_operand.hbm [shape: f32[8,128], index: 6, kind: output, shape index: {}]
  %s7 = sld [smem:[#allocation0]]
  $region54: #{tpu_custom_call.1} parent=0
    _
  %s9 = ssub.s32 1, %s7
  %s10 = scalar_select 0, %s9, %s7
  $region1: #{tpu_custom_call.1} parent=0
    #allocation2 [shape = 'u8[8192]{0}', space=vmem, size = 0x2000, scoped, tag = 'input window, operand 0, single buffered']
    #allocation3 [shape = 's32[1]{0}', space=sflag, size = 0x4, scoped, tag = 'scoped memory for tpu_custom_call.1']
    #allocation4 [shape = 's32[1]{0}', space=sflag, size = 0x4, scoped, tag = 'scoped memory for tpu_custom_call.1']
    #allocation5 [shape = 'u8[8192]{0}', space=vmem, size = 0x2000, scoped, tag = 'input window, operand 1, single buffered']
    #allocation6 [shape = 's32[1]{0}', space=sflag, size = 0x4, scoped, tag = 'scoped memory for tpu_custom_call.1']
    #allocation7 [shape = 'u8[2048]{0}', space=vmem, size = 0x800, scoped, tag = 'input window, operand 2, single buffered']
    #allocation8 [shape = 'u8[100352]{0}', space=vmem, size = 0x18800, scoped, tag = 'input window, operand 3, single buffered']
    #allocation9 [shape = 's32[1]{0}', space=sflag, size = 0x4, scoped, tag = 'scoped memory for tpu_custom_call.1']
    #allocation10 [shape = 'u8[196608]{0}', space=vmem, size = 0x30000, scoped, tag = 'input window, operand 4, single buffered']
    #allocation11 [shape = 'u8[4096]{0}', space=vmem, size = 0x1000, scoped, tag = 'output window, operand 0, single buffered']
    %11 = vsyncpa [#allocation3], 0
    %12 = vsyncpa [#allocation6], 0
    %13 = vsyncpa [#allocation9], 0
    %14 = vsyncpa [#allocation4], 0
    // Predicated region
    $region2: #{tpu_custom_call.1} parent=1 // pred_check
      _
    $region3: #{tpu_custom_call.1} parent=1 // pred_check_branch
      %16 = sbr.rel (0) target = $region5
    $region4: #{tpu_custom_call.1} parent=1 // pred_region
      %s18 = ssub.s32 256, 256
      %19 = vsyncadd [#allocation3], %s18
      %s20 = sshll.u32 [#allocation2], 4
      %s21 = int_to_ptr.vmem [resolvable:$true] %s20
      %26 = dma.hbm_to_vmem [thread:$0]  %s0, 256, %s21, [#allocation3], 64, 64, 4
    $region5: #{tpu_custom_call.1} parent=1 // pred_fallthru
      _
    // Predicated region
    $region6: #{tpu_custom_call.1} parent=1 // pred_check
      _
    $region7: #{tpu_custom_call.1} parent=1 // pred_check_branch
      %28 = sbr.rel (0) target = $region9
    $region8: #{tpu_custom_call.1} parent=1 // pred_region
      %s30 = ssub.s32 256, 256
      %31 = vsyncadd [#allocation6], %s30
      %s32 = sshll.u32 [#allocation5], 4
      %s33 = int_to_ptr.vmem [resolvable:$true] %s32
      %38 = dma.hbm_to_vmem [thread:$0]  %s1, 256, %s33, [#allocation6], 64, 64, 4
    $region9: #{tpu_custom_call.1} parent=1 // pred_fallthru
      _
    // Predicated region
    $region10: #{tpu_custom_call.1} parent=1 // pred_check
      _
    $region11: #{tpu_custom_call.1} parent=1 // pred_check_branch
      %40 = sbr.rel (0) target = $region13
    $region12: #{tpu_custom_call.1} parent=1 // pred_region
      %s42 = ssub.s32 64, 64
      %43 = vsyncadd [#allocation6], %s42
      %s45 = sshll.u32 [#allocation7], 4
      %s46 = int_to_ptr.vmem [resolvable:$true] %s45
      %48 = dma.hbm_to_vmem [thread:$0]  %s2, 64, %s46, [#allocation6]
    $region13: #{tpu_custom_call.1} parent=1 // pred_fallthru
      _
    // Predicated region
    $region14: #{tpu_custom_call.1} parent=1 // pred_check
      _
    $region15: #{tpu_custom_call.1} parent=1 // pred_check_branch
      %50 = sbr.rel (0) target = $region17
    $region16: #{tpu_custom_call.1} parent=1 // pred_region
      %s52 = ssub.s32 3136, 3136
      %53 = vsyncadd [#allocation9], %s52
      %s54 = sshll.u32 [#allocation8], 4
      %s55 = int_to_ptr.vmem [resolvable:$true] %s54
      %60 = dma.hbm_to_vmem [thread:$0]  %s3, 3136, %s55, [#allocation9], 64, 64, 4
    $region17: #{tpu_custom_call.1} parent=1 // pred_fallthru
      _
    // Predicated region
    $region18: #{tpu_custom_call.1} parent=1 // pred_check
      _
    $region19: #{tpu_custom_call.1} parent=1 // pred_check_branch
      %62 = sbr.rel (0) target = $region21
    $region20: #{tpu_custom_call.1} parent=1 // pred_region
      %s64 = ssub.s32 6144, 6144
      %65 = vsyncadd [#allocation9], %s64
      %s66 = sshll.u32 [#allocation10], 4
      %s67 = int_to_ptr.vmem [resolvable:$true] %s66
      %72 = dma.hbm_to_vmem [thread:$0]  %s4, 6144, %s67, [#allocation9], 128, 128, 8
    $region21: #{tpu_custom_call.1} parent=1 // pred_fallthru
      _
    // Predicated region
    $region22: #{tpu_custom_call.1} parent=1 // pred_check
      _
    $region23: #{tpu_custom_call.1} parent=1 // pred_check_branch
      %74 = sbr.rel (0) target = $region25
    $region24: #{tpu_custom_call.1} parent=1 // pred_region
      _
    $region25: #{tpu_custom_call.1} parent=1 // pred_fallthru
      _
    // Predicated region
    $region26: #{tpu_custom_call.1} parent=1 // pred_check
      _
    $region27: #{tpu_custom_call.1} parent=1 // pred_check_branch
      %76 = sbr.rel (0) target = $region29
    $region28: #{tpu_custom_call.1} parent=1 // pred_region
      %77 = dma.done [#allocation3], 256
    $region29: #{tpu_custom_call.1} parent=1 // pred_fallthru
      _
    // Predicated region
    $region30: #{tpu_custom_call.1} parent=1 // pred_check
      _
    $region31: #{tpu_custom_call.1} parent=1 // pred_check_branch
      %79 = sbr.rel (0) target = $region33
    $region32: #{tpu_custom_call.1} parent=1 // pred_region
      %80 = dma.done [#allocation6], 256
    $region33: #{tpu_custom_call.1} parent=1 // pred_fallthru
      _
    // Predicated region
    $region34: #{tpu_custom_call.1} parent=1 // pred_check
      _
    $region35: #{tpu_custom_call.1} parent=1 // pred_check_branch
      %82 = sbr.rel (0) target = $region37
    $region36: #{tpu_custom_call.1} parent=1 // pred_region
      %83 = dma.done [#allocation6], 64
    $region37: #{tpu_custom_call.1} parent=1 // pred_fallthru
      _
    // Predicated region
    $region38: #{tpu_custom_call.1} parent=1 // pred_check
      _
    $region39: #{tpu_custom_call.1} parent=1 // pred_check_branch
      %85 = sbr.rel (0) target = $region41
    $region40: #{tpu_custom_call.1} parent=1 // pred_region
      %86 = dma.done [#allocation9], 3136
    $region41: #{tpu_custom_call.1} parent=1 // pred_fallthru
      _
    // Predicated region
    $region42: #{tpu_custom_call.1} parent=1 // pred_check
      _
    $region43: #{tpu_custom_call.1} parent=1 // pred_check_branch
      %88 = sbr.rel (0) target = $region45
    $region44: #{tpu_custom_call.1} parent=1 // pred_region
      %89 = dma.done [#allocation9], 6144
    $region45: #{tpu_custom_call.1} parent=1 // pred_fallthru
      _
    %v91 = vld [vmem:[#allocation2] sm:$0xf]
    %v92 = vld [vmem:[#allocation2 + $0x4] sm:$0xf]
    %v93 = vld [vmem:[#allocation2 + $0x8] sm:$0xf]
    %v94 = vld [vmem:[#allocation2 + $0xc] sm:$0xf]
    %v95 = vld [vmem:[#allocation5] sm:$0xf]
    %v96 = vld [vmem:[#allocation5 + $0x4] sm:$0xf]
    %v97 = vld [vmem:[#allocation5 + $0x8] sm:$0xf]
    %v98 = vld [vmem:[#allocation5 + $0xc] sm:$0xf]
    %v99 = vld [vmem:[#allocation8] sm:$0xf]
    %v100 = vld [vmem:[#allocation8 + $0x4] sm:$0xf]
    %v101 = vld [vmem:[#allocation8 + $0x8] sm:$0xf]
    %v102 = vld [vmem:[#allocation8 + $0xc] sm:$0xf]
    %v107 = vunpack.c.l.b16 %v91
    %v108 = vunpack.c.l.b16 %v92
    %v109 = vunpack.c.l.b16 %v93
    %v110 = vunpack.c.l.b16 %v94
    %v111 = vpack.c.b16 %v108, %v107
    %v112 = vpack.c.b16 %v110, %v109
    %v117 = vunpack.c.l.b16 %v99
    %v118 = vunpack.c.l.b16 %v100
    %v119 = vunpack.c.l.b16 %v101
    %v120 = vunpack.c.l.b16 %v102
    %v121 = vpack.c.b16 %v118, %v117
    %v122 = vpack.c.b16 %v120, %v119
    %vm125 = vcmask 261120
    %v127 = vsel %vm125, %v111, 0
    %v130 = vsel %vm125, %v112, 0
    %132 = vmatprep.subr.bf16.mxu0 0
    %133 = vmatpush1.bf16.msra.mxu0 %v121
    %134 = vmatprep.subr.bf16.mxu0 0
    %135 = vmatpush1.bf16.msra.mxu0 %v122
    %136 = vmatprep.subr.bf16.mxu0 0
    %137 = vmatpush1.bf16.msra.mxu0 0
    %138 = vmatprep.subr.bf16.mxu0 0
    %139 = vmatpush1.bf16.msra.mxu0 0
    %140 = vmatprep.subr.bf16.mxu0 0
    %141 = vmatpush1.bf16.msra.mxu0 0
    %142 = vmatprep.subr.bf16.mxu0 0
    %143 = vmatpush1.bf16.msra.mxu0 0
    %144 = vmatprep.subr.bf16.mxu0 0
    %145 = vmatpush1.bf16.msra.mxu0 0
    %146 = vmatprep.subr.bf16.mxu0 0
    %147 = vmatpush1.bf16.msra.mxu0 0
    %148 = vmatprep.subr.bf16.mxu0 0
    %149 = vmatpush1.bf16.msra.mxu0 0
    %150 = vmatprep.subr.bf16.mxu0 0
    %151 = vmatpush1.bf16.msra.mxu0 0
    %152 = vmatprep.subr.bf16.mxu0 0
    %153 = vmatpush1.bf16.msra.mxu0 0
    %154 = vmatprep.subr.bf16.mxu0 0
    %155 = vmatpush1.bf16.msra.mxu0 0
    %156 = vmatprep.subr.bf16.mxu0 0
    %157 = vmatpush1.bf16.msra.mxu0 0
    %158 = vmatprep.subr.bf16.mxu0 0
    %159 = vmatpush1.bf16.msra.mxu0 0
    %160 = vmatprep.subr.bf16.mxu0 0
    %161 = vmatpush1.bf16.msra.mxu0 0
    %162 = vmatprep.subr.bf16.mxu0 0
    %163 = vmatpush1.bf16.msra.mxu0 0
    %164 = vmatprep.mubr.bf16.mxu0 0
    %165 = vmatmul.mubr.bf16.gmra.mrb[0].mxu0 %v127
    %v166 = vpop.f32.mrb[0].mxu0
    %v167 = vadd.f32 0.0, %v166
    %v168 = vpop.f32.mrb[0].mxu0
    %v169 = vpop.f32.mrb[0].mxu0
    %v170 = vadd.f32 0.0, %v169
    %v171 = vpop.f32.mrb[0].mxu0
    %172 = vmatprep.mubr.bf16.mxu0 0
    %173 = vmatmul.mubr.bf16.gmra.mrb[0].mxu0 %v130
    %v174 = vpop.f32.mrb[0].mxu0
    %v175 = vadd.f32 0.0, %v174
    %v176 = vpop.f32.mrb[0].mxu0
    %v177 = vpop.f32.mrb[0].mxu0
    %v178 = vadd.f32 0.0, %v177
    %v179 = vpop.f32.mrb[0].mxu0
    %180 = vdwg.mxu0
    %v181 = vld [vmem:[#allocation8 + $0x10] sm:$0xf]
    %v182 = vpack.c.bf16 %v170, %v167
    %v183 = vpack.c.bf16 %v178, %v175
    %vm184 = vcmask 64512
    %v186 = vsel %vm184, %v182, 0
    %v189 = vsel %vm184, %v183, 0
    %vm191 = vcmask 1043456
    %v193 = vsel %vm191, %v181, 0
    %195 = vmatprep.subr.bf16.mxu0 0
    %196 = vmatpush1.bf16.msra.mxu0 %v193
    %197 = vmatprep.subr.bf16.mxu0 0
    %198 = vmatpush1.bf16.msra.mxu0 0
    %199 = vmatprep.subr.bf16.mxu0 0
    %200 = vmatpush1.bf16.msra.mxu0 0
    %201 = vmatprep.subr.bf16.mxu0 0
    %202 = vmatpush1.bf16.msra.mxu0 0
    %203 = vmatprep.subr.bf16.mxu0 0
    %204 = vmatpush1.bf16.msra.mxu0 0
    %205 = vmatprep.subr.bf16.mxu0 0
    %206 = vmatpush1.bf16.msra.mxu0 0
    %207 = vmatprep.subr.bf16.mxu0 0
    %208 = vmatpush1.bf16.msra.mxu0 0
    %209 = vmatprep.subr.bf16.mxu0 0
    %210 = vmatpush1.bf16.msra.mxu0 0
    %211 = vmatprep.subr.bf16.mxu0 0
    %212 = vmatpush1.bf16.msra.mxu0 0
    %213 = vmatprep.subr.bf16.mxu0 0
    %214 = vmatpush1.bf16.msra.mxu0 0
    %215 = vmatprep.subr.bf16.mxu0 0
    %216 = vmatpush1.bf16.msra.mxu0 0
    %217 = vmatprep.subr.bf16.mxu0 0
    %218 = vmatpush1.bf16.msra.mxu0 0
    %219 = vmatprep.subr.bf16.mxu0 0
    %220 = vmatpush1.bf16.msra.mxu0 0
    %221 = vmatprep.subr.bf16.mxu0 0
    %222 = vmatpush1.bf16.msra.mxu0 0
    %223 = vmatprep.subr.bf16.mxu0 0
    %224 = vmatpush1.bf16.msra.mxu0 0
    %225 = vmatprep.subr.bf16.mxu0 0
    %226 = vmatpush1.bf16.msra.mxu0 0
    %227 = vmatprep.mubr.bf16.mxu0 0
    %228 = vmatmul.mubr.bf16.gmra.mrb[0].mxu0 %v186
    %v229 = vpop.f32.mrb[0].mxu0
    %v230 = vadd.f32 0.0, %v229
    %v231 = vpop.f32.mrb[0].mxu0
    %v232 = vpop.f32.mrb[0].mxu0
    %v233 = vadd.f32 0.0, %v232
    %v234 = vpop.f32.mrb[0].mxu0
    %235 = vmatprep.mubr.bf16.mxu0 0
    %236 = vmatmul.mubr.bf16.gmra.mrb[0].mxu0 %v189
    %v237 = vpop.f32.mrb[0].mxu0
    %v238 = vadd.f32 0.0, %v237
    %v239 = vpop.f32.mrb[0].mxu0
    %v240 = vpop.f32.mrb[0].mxu0
    %v241 = vadd.f32 0.0, %v240
    %v242 = vpop.f32.mrb[0].mxu0
    %243 = vdwg.mxu0
    %v244 = vpack.c.bf16 %v233, %v230
    %v245 = vpack.c.bf16 %v241, %v238
    %v246 = vld [vmem:[%s5] ss:$0 sm:$0xff]
    %v251 = vunpack.c.l.b16 %v95
    %v252 = vunpack.c.l.b16 %v96
    %v253 = vunpack.c.l.b16 %v97
    %v254 = vunpack.c.l.b16 %v98
    %v255 = vpack.c.b16 %v252, %v251
    %v256 = vpack.c.b16 %v254, %v253
    %v258 = vsel %vm125, %v255, 0
    %v261 = vsel %vm125, %v256, 0
    %263 = vmatprep.subr.bf16.mxu0 0
    %264 = vmatpush1.bf16.msra.mxu0 %v244
    %265 = vmatprep.subr.bf16.mxu0 0
    %266 = vmatpush1.bf16.msra.mxu0 %v245
    %267 = vmatprep.subr.bf16.mxu0 0
    %268 = vmatpush1.bf16.msra.mxu0 0
    %269 = vmatprep.subr.bf16.mxu0 0
    %270 = vmatpush1.bf16.msra.mxu0 0
    %271 = vmatprep.subr.bf16.mxu0 0
    %272 = vmatpush1.bf16.msra.mxu0 0
    %273 = vmatprep.subr.bf16.mxu0 0
    %274 = vmatpush1.bf16.msra.mxu0 0
    %275 = vmatprep.subr.bf16.mxu0 0
    %276 = vmatpush1.bf16.msra.mxu0 0
    %277 = vmatprep.subr.bf16.mxu0 0
    %278 = vmatpush1.bf16.msra.mxu0 0
    %279 = vmatprep.subr.bf16.mxu0 0
    %280 = vmatpush1.bf16.msra.mxu0 0
    %281 = vmatprep.subr.bf16.mxu0 0
    %282 = vmatpush1.bf16.msra.mxu0 0
    %283 = vmatprep.subr.bf16.mxu0 0
    %284 = vmatpush1.bf16.msra.mxu0 0
    %285 = vmatprep.subr.bf16.mxu0 0
    %286 = vmatpush1.bf16.msra.mxu0 0
    %287 = vmatprep.subr.bf16.mxu0 0
    %288 = vmatpush1.bf16.msra.mxu0 0
    %289 = vmatprep.subr.bf16.mxu0 0
    %290 = vmatpush1.bf16.msra.mxu0 0
    %291 = vmatprep.subr.bf16.mxu0 0
    %292 = vmatpush1.bf16.msra.mxu0 0
    %293 = vmatprep.subr.bf16.mxu0 0
    %294 = vmatpush1.bf16.msra.mxu0 0
    %295 = vmatprep.mubr.bf16.mxu0 0
    %296 = vmatmul.mubr.bf16.gmra.mrb[0].mxu0 %v258
    %v297 = vpop.f32.mrb[0].mxu0
    %v298 = vadd.f32 %v246, %v297
    %v299 = vpop.f32.mrb[0].mxu0
    %v300 = vpop.f32.mrb[0].mxu0
    %v301 = vadd.f32 %v246, %v300
    %v302 = vpop.f32.mrb[0].mxu0
    %303 = vmatprep.mubr.bf16.mxu0 0
    %304 = vmatmul.mubr.bf16.gmra.mrb[0].mxu0 %v261
    %v305 = vpop.f32.mrb[0].mxu0
    %v306 = vadd.f32 %v246, %v305
    %v307 = vpop.f32.mrb[0].mxu0
    %v308 = vpop.f32.mrb[0].mxu0
    %v309 = vadd.f32 %v246, %v308
    %v310 = vpop.f32.mrb[0].mxu0
    %311 = vdwg.mxu0
    %v312 = vmax.f32 %v298, 0.0
    %v313 = vmax.f32 %v301, 0.0
    %v314 = vmax.f32 %v306, 0.0
    %v315 = vmax.f32 %v309, 0.0
    %v316 = vld [vmem:[#allocation8 + $0x14] sm:$0xf]
    %v317 = vld [vmem:[#allocation8 + $0x18] sm:$0xf]
    %v318 = vld [vmem:[#allocation8 + $0x1c] sm:$0xf]
    %v319 = vld [vmem:[#allocation8 + $0x20] sm:$0xf]
    %v320 = vpack.c.bf16 %v313, %v312
    %v321 = vpack.c.bf16 %v315, %v314
    %v326 = vunpack.c.l.b16 %v316
    %v327 = vunpack.c.l.b16 %v317
    %v328 = vunpack.c.l.b16 %v318
    %v329 = vunpack.c.l.b16 %v319
    %v330 = vpack.c.b16 %v327, %v326
    %v331 = vpack.c.b16 %v329, %v328
    %v335 = vsel %vm125, %v320, 0
    %v338 = vsel %vm125, %v321, 0
    %340 = vmatprep.subr.bf16.mxu0 0
    %341 = vmatpush1.bf16.msra.mxu0 %v330
    %342 = vmatprep.subr.bf16.mxu0 0
    %343 = vmatpush1.bf16.msra.mxu0 %v331
    %344 = vmatprep.subr.bf16.mxu0 0
    %345 = vmatpush1.bf16.msra.mxu0 0
    %346 = vmatprep.subr.bf16.mxu0 0
    %347 = vmatpush1.bf16.msra.mxu0 0
    %348 = vmatprep.subr.bf16.mxu0 0
    %349 = vmatpush1.bf16.msra.mxu0 0
    %350 = vmatprep.subr.bf16.mxu0 0
    %351 = vmatpush1.bf16.msra.mxu0 0
    %352 = vmatprep.subr.bf16.mxu0 0
    %353 = vmatpush1.bf16.msra.mxu0 0
    %354 = vmatprep.subr.bf16.mxu0 0
    %355 = vmatpush1.bf16.msra.mxu0 0
    %356 = vmatprep.subr.bf16.mxu0 0
    %357 = vmatpush1.bf16.msra.mxu0 0
    %358 = vmatprep.subr.bf16.mxu0 0
    %359 = vmatpush1.bf16.msra.mxu0 0
    %360 = vmatprep.subr.bf16.mxu0 0
    %361 = vmatpush1.bf16.msra.mxu0 0
    %362 = vmatprep.subr.bf16.mxu0 0
    %363 = vmatpush1.bf16.msra.mxu0 0
    %364 = vmatprep.subr.bf16.mxu0 0
    %365 = vmatpush1.bf16.msra.mxu0 0
    %366 = vmatprep.subr.bf16.mxu0 0
    %367 = vmatpush1.bf16.msra.mxu0 0
    %368 = vmatprep.subr.bf16.mxu0 0
    %369 = vmatpush1.bf16.msra.mxu0 0
    %370 = vmatprep.subr.bf16.mxu0 0
    %371 = vmatpush1.bf16.msra.mxu0 0
    %372 = vmatprep.mubr.bf16.mxu0 0
    %373 = vmatmul.mubr.bf16.gmra.mrb[0].mxu0 %v335
    %v374 = vpop.f32.mrb[0].mxu0
    %v375 = vadd.f32 0.0, %v374
    %v376 = vpop.f32.mrb[0].mxu0
    %v377 = vpop.f32.mrb[0].mxu0
    %v378 = vadd.f32 0.0, %v377
    %v379 = vpop.f32.mrb[0].mxu0
    %380 = vmatprep.mubr.bf16.mxu0 0
    %381 = vmatmul.mubr.bf16.gmra.mrb[0].mxu0 %v338
    %v382 = vpop.f32.mrb[0].mxu0
    %v383 = vadd.f32 0.0, %v382
    %v384 = vpop.f32.mrb[0].mxu0
    %v385 = vpop.f32.mrb[0].mxu0
    %v386 = vadd.f32 0.0, %v385
    %v387 = vpop.f32.mrb[0].mxu0
    %388 = vdwg.mxu0
    %v389 = vpack.c.bf16 %v378, %v375
    %v390 = vpack.c.bf16 %v386, %v383
    %v391 = vld [vmem:[%s5 + $0x1] ss:$0 sm:$0xff]
    %392 = vmatprep.subr.bf16.mxu0 0
    %393 = vmatpush1.bf16.msra.mxu0 %v389
    %394 = vmatprep.subr.bf16.mxu0 0
    %395 = vmatpush1.bf16.msra.mxu0 %v390
    %396 = vmatprep.subr.bf16.mxu0 0
    %397 = vmatpush1.bf16.msra.mxu0 0
    %398 = vmatprep.subr.bf16.mxu0 0
    %399 = vmatpush1.bf16.msra.mxu0 0
    %400 = vmatprep.subr.bf16.mxu0 0
    %401 = vmatpush1.bf16.msra.mxu0 0
    %402 = vmatprep.subr.bf16.mxu0 0
    %403 = vmatpush1.bf16.msra.mxu0 0
    %404 = vmatprep.subr.bf16.mxu0 0
    %405 = vmatpush1.bf16.msra.mxu0 0
    %406 = vmatprep.subr.bf16.mxu0 0
    %407 = vmatpush1.bf16.msra.mxu0 0
    %408 = vmatprep.subr.bf16.mxu0 0
    %409 = vmatpush1.bf16.msra.mxu0 0
    %410 = vmatprep.subr.bf16.mxu0 0
    %411 = vmatpush1.bf16.msra.mxu0 0
    %412 = vmatprep.subr.bf16.mxu0 0
    %413 = vmatpush1.bf16.msra.mxu0 0
    %414 = vmatprep.subr.bf16.mxu0 0
    %415 = vmatpush1.bf16.msra.mxu0 0
    %416 = vmatprep.subr.bf16.mxu0 0
    %417 = vmatpush1.bf16.msra.mxu0 0
    %418 = vmatprep.subr.bf16.mxu0 0
    %419 = vmatpush1.bf16.msra.mxu0 0
    %420 = vmatprep.subr.bf16.mxu0 0
    %421 = vmatpush1.bf16.msra.mxu0 0
    %422 = vmatprep.subr.bf16.mxu0 0
    %423 = vmatpush1.bf16.msra.mxu0 0
    %424 = vmatprep.mubr.bf16.mxu0 0
    %425 = vmatmul.mubr.bf16.gmra.mrb[0].mxu0 %v258
    %v426 = vpop.f32.mrb[0].mxu0
    %v427 = vadd.f32 %v391, %v426
    %v428 = vpop.f32.mrb[0].mxu0
    %v429 = vpop.f32.mrb[0].mxu0
    %v430 = vadd.f32 %v391, %v429
    %v431 = vpop.f32.mrb[0].mxu0
    %432 = vmatprep.mubr.bf16.mxu0 0
    %433 = vmatmul.mubr.bf16.gmra.mrb[0].mxu0 %v261
    %v434 = vpop.f32.mrb[0].mxu0
    %v435 = vadd.f32 %v391, %v434
    %v436 = vpop.f32.mrb[0].mxu0
    %v437 = vpop.f32.mrb[0].mxu0
    %v438 = vadd.f32 %v391, %v437
    %v439 = vpop.f32.mrb[0].mxu0
    %440 = vdwg.mxu0
    %v441 = vmax.f32 %v427, 0.0
    %v442 = vmax.f32 %v430, 0.0
    %v443 = vmax.f32 %v435, 0.0
    %v444 = vmax.f32 %v438, 0.0
    %v445 = vld [vmem:[#allocation8 + $0x24] sm:$0xf]
    %v446 = vld [vmem:[#allocation8 + $0x28] sm:$0xf]
    %v447 = vld [vmem:[#allocation8 + $0x2c] sm:$0xf]
    %v448 = vld [vmem:[#allocation8 + $0x30] sm:$0xf]
    %v449 = vld [vmem:[#allocation8 + $0x34] sm:$0xf]
    %v450 = vld [vmem:[#allocation8 + $0x38] sm:$0xf]
    %v451 = vld [vmem:[#allocation8 + $0x3c] sm:$0xf]
    %v452 = vld [vmem:[#allocation8 + $0x40] sm:$0xf]
    %v453 = vpack.c.bf16 %v442, %v441
    %v454 = vpack.c.bf16 %v444, %v443
    %v463 = vunpack.c.l.b16 %v445
    %v464 = vunpack.c.l.b16 %v446
    %v465 = vunpack.c.l.b16 %v447
    %v466 = vunpack.c.l.b16 %v448
    %v467 = vunpack.c.l.b16 %v449
    %v468 = vunpack.c.l.b16 %v450
    %v469 = vunpack.c.l.b16 %v451
    %v470 = vunpack.c.l.b16 %v452
    %v471 = vpack.c.b16 %v464, %v463
    %v472 = vpack.c.b16 %v466, %v465
    %v473 = vpack.c.b16 %v468, %v467
    %v474 = vpack.c.b16 %v470, %v469
    %vm479 = vcmask 523264
    %v481 = vsel %vm479, %v453, 0
    %v484 = vsel %vm479, %v454, 0
    %486 = vmatprep.subr.bf16.mxu0 0
    %487 = vmatpush1.bf16.msra.mxu0 %v471
    %488 = vmatprep.subr.bf16.mxu0 0
    %489 = vmatpush1.bf16.msra.mxu0 %v472
    %490 = vmatprep.subr.bf16.mxu0 0
    %491 = vmatpush1.bf16.msra.mxu0 %v473
    %492 = vmatprep.subr.bf16.mxu0 0
    %493 = vmatpush1.bf16.msra.mxu0 %v474
    %494 = vmatprep.subr.bf16.mxu0 0
    %495 = vmatpush1.bf16.msra.mxu0 0
    %496 = vmatprep.subr.bf16.mxu0 0
    %497 = vmatpush1.bf16.msra.mxu0 0
    %498 = vmatprep.subr.bf16.mxu0 0
    %499 = vmatpush1.bf16.msra.mxu0 0
    %500 = vmatprep.subr.bf16.mxu0 0
    %501 = vmatpush1.bf16.msra.mxu0 0
    %502 = vmatprep.subr.bf16.mxu0 0
    %503 = vmatpush1.bf16.msra.mxu0 0
    %504 = vmatprep.subr.bf16.mxu0 0
    %505 = vmatpush1.bf16.msra.mxu0 0
    %506 = vmatprep.subr.bf16.mxu0 0
    %507 = vmatpush1.bf16.msra.mxu0 0
    %508 = vmatprep.subr.bf16.mxu0 0
    %509 = vmatpush1.bf16.msra.mxu0 0
    %510 = vmatprep.subr.bf16.mxu0 0
    %511 = vmatpush1.bf16.msra.mxu0 0
    %512 = vmatprep.subr.bf16.mxu0 0
    %513 = vmatpush1.bf16.msra.mxu0 0
    %514 = vmatprep.subr.bf16.mxu0 0
    %515 = vmatpush1.bf16.msra.mxu0 0
    %516 = vmatprep.subr.bf16.mxu0 0
    %517 = vmatpush1.bf16.msra.mxu0 0
    %518 = vmatprep.mubr.bf16.mxu0 0
    %519 = vmatmul.mubr.bf16.gmra.mrb[0].mxu0 %v481
    %v520 = vpop.f32.mrb[0].mxu0
    %v521 = vadd.f32 0.0, %v520
    %v522 = vpop.f32.mrb[0].mxu0
    %v523 = vpop.f32.mrb[0].mxu0
    %v524 = vadd.f32 0.0, %v523
    %v525 = vpop.f32.mrb[0].mxu0
    %526 = vmatprep.mubr.bf16.mxu0 0
    %527 = vmatmul.mubr.bf16.gmra.mrb[0].mxu0 %v484
    %v528 = vpop.f32.mrb[0].mxu0
    %v529 = vadd.f32 0.0, %v528
    %v530 = vpop.f32.mrb[0].mxu0
    %v531 = vpop.f32.mrb[0].mxu0
    %v532 = vadd.f32 0.0, %v531
    %v533 = vpop.f32.mrb[0].mxu0
    %534 = vdwg.mxu0
    %v535 = vpack.c.bf16 %v524, %v521
    %v536 = vpack.c.bf16 %v532, %v529
    %v537 = vld [vmem:[%s5 + $0x2] ss:$0 sm:$0xff]
    %538 = vmatprep.subr.bf16.mxu0 0
    %539 = vmatpush1.bf16.msra.mxu0 %v535
    %540 = vmatprep.subr.bf16.mxu0 0
    %541 = vmatpush1.bf16.msra.mxu0 %v536
    %542 = vmatprep.subr.bf16.mxu0 0
    %543 = vmatpush1.bf16.msra.mxu0 0
    %544 = vmatprep.subr.bf16.mxu0 0
    %545 = vmatpush1.bf16.msra.mxu0 0
    %546 = vmatprep.subr.bf16.mxu0 0
    %547 = vmatpush1.bf16.msra.mxu0 0
    %548 = vmatprep.subr.bf16.mxu0 0
    %549 = vmatpush1.bf16.msra.mxu0 0
    %550 = vmatprep.subr.bf16.mxu0 0
    %551 = vmatpush1.bf16.msra.mxu0 0
    %552 = vmatprep.subr.bf16.mxu0 0
    %553 = vmatpush1.bf16.msra.mxu0 0
    %554 = vmatprep.subr.bf16.mxu0 0
    %555 = vmatpush1.bf16.msra.mxu0 0
    %556 = vmatprep.subr.bf16.mxu0 0
    %557 = vmatpush1.bf16.msra.mxu0 0
    %558 = vmatprep.subr.bf16.mxu0 0
    %559 = vmatpush1.bf16.msra.mxu0 0
    %560 = vmatprep.subr.bf16.mxu0 0
    %561 = vmatpush1.bf16.msra.mxu0 0
    %562 = vmatprep.subr.bf16.mxu0 0
    %563 = vmatpush1.bf16.msra.mxu0 0
    %564 = vmatprep.subr.bf16.mxu0 0
    %565 = vmatpush1.bf16.msra.mxu0 0
    %566 = vmatprep.subr.bf16.mxu0 0
    %567 = vmatpush1.bf16.msra.mxu0 0
    %568 = vmatprep.subr.bf16.mxu0 0
    %569 = vmatpush1.bf16.msra.mxu0 0
    %570 = vmatprep.mubr.bf16.mxu0 0
    %571 = vmatmul.mubr.bf16.gmra.mrb[0].mxu0 %v258
    %v572 = vpop.f32.mrb[0].mxu0
    %v573 = vadd.f32 %v537, %v572
    %v574 = vpop.f32.mrb[0].mxu0
    %v575 = vpop.f32.mrb[0].mxu0
    %v576 = vadd.f32 %v537, %v575
    %v577 = vpop.f32.mrb[0].mxu0
    %578 = vmatprep.mubr.bf16.mxu0 0
    %579 = vmatmul.mubr.bf16.gmra.mrb[0].mxu0 %v261
    %v580 = vpop.f32.mrb[0].mxu0
    %v581 = vadd.f32 %v537, %v580
    %v582 = vpop.f32.mrb[0].mxu0
    %v583 = vpop.f32.mrb[0].mxu0
    %v584 = vadd.f32 %v537, %v583
    %v585 = vpop.f32.mrb[0].mxu0
    %586 = vdwg.mxu0
    %v587 = vmax.f32 %v573, 0.0
    %v588 = vmax.f32 %v576, 0.0
    %v589 = vmax.f32 %v581, 0.0
    %v590 = vmax.f32 %v584, 0.0
    %v591 = vld [vmem:[#allocation7] sm:$0xf]
    %v592 = vpack.c.bf16 %v588, %v587
    %v593 = vpack.c.bf16 %v590, %v589
    %v595 = vsel %vm125, %v591, 0
    %597 = vmatprep.subr.bf16.mxu0 0
    %598 = vmatpush1.bf16.msra.mxu0 %v592
    %599 = vmatprep.subr.bf16.mxu0 0
    %600 = vmatpush1.bf16.msra.mxu0 %v593
    %601 = vmatprep.subr.bf16.mxu0 0
    %602 = vmatpush1.bf16.msra.mxu0 0
    %603 = vmatprep.subr.bf16.mxu0 0
    %604 = vmatpush1.bf16.msra.mxu0 0
    %605 = vmatprep.subr.bf16.mxu0 0
    %606 = vmatpush1.bf16.msra.mxu0 0
    %607 = vmatprep.subr.bf16.mxu0 0
    %608 = vmatpush1.bf16.msra.mxu0 0
    %609 = vmatprep.subr.bf16.mxu0 0
    %610 = vmatpush1.bf16.msra.mxu0 0
    %611 = vmatprep.subr.bf16.mxu0 0
    %612 = vmatpush1.bf16.msra.mxu0 0
    %613 = vmatprep.subr.bf16.mxu0 0
    %614 = vmatpush1.bf16.msra.mxu0 0
    %615 = vmatprep.subr.bf16.mxu0 0
    %616 = vmatpush1.bf16.msra.mxu0 0
    %617 = vmatprep.subr.bf16.mxu0 0
    %618 = vmatpush1.bf16.msra.mxu0 0
    %619 = vmatprep.subr.bf16.mxu0 0
    %620 = vmatpush1.bf16.msra.mxu0 0
    %621 = vmatprep.subr.bf16.mxu0 0
    %622 = vmatpush1.bf16.msra.mxu0 0
    %623 = vmatprep.subr.bf16.mxu0 0
    %624 = vmatpush1.bf16.msra.mxu0 0
    %625 = vmatprep.subr.bf16.mxu0 0
    %626 = vmatpush1.bf16.msra.mxu0 0
    %627 = vmatprep.subr.bf16.mxu0 0
    %628 = vmatpush1.bf16.msra.mxu0 0
    %629 = vmatprep.mubr.bf16.mxu0 0
    %630 = vmatmul.mubr.bf16.gmra.mrb[0].mxu0 %v595
    %v631 = vpop.f32.mrb[0].mxu0
    %v632 = vadd.f32 0.0, %v631
    %v633 = vpop.f32.mrb[0].mxu0
    %v634 = vpop.f32.mrb[0].mxu0
    %v635 = vpop.f32.mrb[0].mxu0
    %636 = vdwg.mxu0
    %v637 = vpack.c.bf16 %v632, %v632
    %v638 = vld [vmem:[#allocation10] sm:$0xff]
    %v639 = vld [vmem:[#allocation10 + $0x8] sm:$0xff]
    %v640 = vld [vmem:[#allocation10 + $0x10] sm:$0xff]
    %v641 = vld [vmem:[#allocation10 + $0x18] sm:$0xff]
    %v642 = vld [vmem:[#allocation10 + $0x20] sm:$0xff]
    %v643 = vld [vmem:[#allocation10 + $0x28] sm:$0xff]
    %v644 = vld [vmem:[#allocation10 + $0x30] sm:$0xff]
    %v645 = vld [vmem:[#allocation10 + $0x38] sm:$0xff]
    %v646 = vld [vmem:[#allocation10 + $0x40] sm:$0xff]
    %v647 = vld [vmem:[#allocation10 + $0x48] sm:$0xff]
    %v648 = vld [vmem:[#allocation10 + $0x50] sm:$0xff]
    %v649 = vld [vmem:[#allocation10 + $0x58] sm:$0xff]
    %v650 = vld [vmem:[#allocation10 + $0x60] sm:$0xff]
    %v651 = vld [vmem:[#allocation10 + $0x68] sm:$0xff]
    %v652 = vld [vmem:[#allocation10 + $0x70] sm:$0xff]
    %v653 = vld [vmem:[#allocation10 + $0x78] sm:$0xff]
    %s654 = scalar_lea.vmem %s5, 3
    %v655 = vld [vmem:[%s654] ss:$8 sm:$0x3]
    %v657 = vlaneseq
    %v658 = vshrl.u32 %v657, 7
    %v659 = vsub.s32 0, %v658
    %v660 = vrot.slane %v655, %v659
    %v661 = vlaneseq
    %v662 = vshrl.u32 %v661, 7
    %v663 = vsub.s32 1, %v662
    %v664 = vrot.slane %v655, %v663
    %v683 = vunpack.c.l.b16 %v638
    %v684 = vunpack.c.h.b16 %v638
    %v685 = vunpack.c.l.b16 %v639
    %v686 = vunpack.c.h.b16 %v639
    %v687 = vunpack.c.l.b16 %v640
    %v688 = vunpack.c.h.b16 %v640
    %v689 = vunpack.c.l.b16 %v641
    %v690 = vunpack.c.h.b16 %v641
    %v691 = vunpack.c.l.b16 %v642
    %v692 = vunpack.c.h.b16 %v642
    %v693 = vunpack.c.l.b16 %v643
    %v694 = vunpack.c.h.b16 %v643
    %v695 = vunpack.c.l.b16 %v644
    %v696 = vunpack.c.h.b16 %v644
    %v697 = vunpack.c.l.b16 %v645
    %v698 = vunpack.c.h.b16 %v645
    %v699 = vunpack.c.l.b16 %v646
    %v700 = vunpack.c.h.b16 %v646
    %v701 = vunpack.c.l.b16 %v647
    %v702 = vunpack.c.h.b16 %v647
    %v703 = vunpack.c.l.b16 %v648
    %v704 = vunpack.c.h.b16 %v648
    %v705 = vunpack.c.l.b16 %v649
    %v706 = vunpack.c.h.b16 %v649
    %v707 = vunpack.c.l.b16 %v650
    %v708 = vunpack.c.h.b16 %v650
    %v709 = vunpack.c.l.b16 %v651
    %v710 = vunpack.c.h.b16 %v651
    %v711 = vunpack.c.l.b16 %v652
    %v712 = vunpack.c.h.b16 %v652
    %v713 = vunpack.c.l.b16 %v653
    %v714 = vunpack.c.h.b16 %v653
    %v715 = vpack.c.b16 %v685, %v683
    %v716 = vpack.c.b16 %v686, %v684
    %v717 = vpack.c.b16 %v689, %v687
    %v718 = vpack.c.b16 %v690, %v688
    %v719 = vpack.c.b16 %v693, %v691
    %v720 = vpack.c.b16 %v694, %v692
    %v721 = vpack.c.b16 %v697, %v695
    %v722 = vpack.c.b16 %v698, %v696
    %v723 = vpack.c.b16 %v701, %v699
    %v724 = vpack.c.b16 %v702, %v700
    %v725 = vpack.c.b16 %v705, %v703
    %v726 = vpack.c.b16 %v706, %v704
    %v727 = vpack.c.b16 %v709, %v707
    %v728 = vpack.c.b16 %v710, %v708
    %v729 = vpack.c.b16 %v713, %v711
    %v730 = vpack.c.b16 %v714, %v712
    %747 = vmatprep.subr.bf16.mxu0 %v716
    %748 = vmatpush1.bf16.msra.mxu0 %v715
    %749 = vmatprep.subr.bf16.mxu0 %v718
    %750 = vmatpush1.bf16.msra.mxu0 %v717
    %751 = vmatprep.subr.bf16.mxu0 %v720
    %752 = vmatpush1.bf16.msra.mxu0 %v719
    %753 = vmatprep.subr.bf16.mxu0 %v722
    %754 = vmatpush1.bf16.msra.mxu0 %v721
    %755 = vmatprep.subr.bf16.mxu0 %v724
    %756 = vmatpush1.bf16.msra.mxu0 %v723
    %757 = vmatprep.subr.bf16.mxu0 %v726
    %758 = vmatpush1.bf16.msra.mxu0 %v725
    %759 = vmatprep.subr.bf16.mxu0 %v728
    %760 = vmatpush1.bf16.msra.mxu0 %v727
    %761 = vmatprep.subr.bf16.mxu0 %v730
    %762 = vmatpush1.bf16.msra.mxu0 %v729
    %763 = vmatprep.subr.bf16.mxu0 0
    %764 = vmatpush1.bf16.msra.mxu0 0
    %765 = vmatprep.subr.bf16.mxu0 0
    %766 = vmatpush1.bf16.msra.mxu0 0
    %767 = vmatprep.subr.bf16.mxu0 0
    %768 = vmatpush1.bf16.msra.mxu0 0
    %769 = vmatprep.subr.bf16.mxu0 0
    %770 = vmatpush1.bf16.msra.mxu0 0
    %771 = vmatprep.subr.bf16.mxu0 0
    %772 = vmatpush1.bf16.msra.mxu0 0
    %773 = vmatprep.subr.bf16.mxu0 0
    %774 = vmatpush1.bf16.msra.mxu0 0
    %775 = vmatprep.subr.bf16.mxu0 0
    %776 = vmatpush1.bf16.msra.mxu0 0
    %777 = vmatprep.subr.bf16.mxu0 0
    %778 = vmatpush1.bf16.msra.mxu0 0
    %779 = vmatprep.mubr.bf16.mxu0 0
    %780 = vmatmul.mubr.bf16.gmra.mrb[0].mxu0 %v637
    %v781 = vpop.f32.mrb[0].mxu0
    %v782 = vadd.f32 %v660, %v781
    %v783 = vpop.f32.mrb[0].mxu0
    %v784 = vadd.f32 %v664, %v783
    %v785 = vpop.f32.mrb[0].mxu0
    %v786 = vpop.f32.mrb[0].mxu0
    %787 = vdwg.mxu0
    %v788 = vmax.f32 %v782, 0.0
    %v789 = vmax.f32 %v784, 0.0
    %v790 = vpack.c.bf16 %v788, %v788
    %v791 = vpack.c.bf16 %v789, %v789
    %v792 = vld [vmem:[#allocation10 + $0x80] sm:$0xff]
    %v793 = vld [vmem:[#allocation10 + $0x88] sm:$0xff]
    %v794 = vld [vmem:[#allocation10 + $0x90] sm:$0xff]
    %v795 = vld [vmem:[#allocation10 + $0x98] sm:$0xff]
    %v796 = vld [vmem:[#allocation10 + $0xa0] sm:$0xff]
    %v797 = vld [vmem:[#allocation10 + $0xa8] sm:$0xff]
    %v798 = vld [vmem:[#allocation10 + $0xb0] sm:$0xff]
    %v799 = vld [vmem:[#allocation10 + $0xb8] sm:$0xff]
    %v800 = vld [vmem:[#allocation10 + $0xc0] sm:$0xff]
    %v801 = vld [vmem:[#allocation10 + $0xc8] sm:$0xff]
    %v802 = vld [vmem:[#allocation10 + $0xd0] sm:$0xff]
    %v803 = vld [vmem:[#allocation10 + $0xd8] sm:$0xff]
    %v804 = vld [vmem:[#allocation10 + $0xe0] sm:$0xff]
    %v805 = vld [vmem:[#allocation10 + $0xe8] sm:$0xff]
    %v806 = vld [vmem:[#allocation10 + $0xf0] sm:$0xff]
    %v807 = vld [vmem:[#allocation10 + $0xf8] sm:$0xff]
    %v808 = vld [vmem:[#allocation10 + $0x100] sm:$0xff]
    %v809 = vld [vmem:[#allocation10 + $0x108] sm:$0xff]
    %v810 = vld [vmem:[#allocation10 + $0x110] sm:$0xff]
    %v811 = vld [vmem:[#allocation10 + $0x118] sm:$0xff]
    %v812 = vld [vmem:[#allocation10 + $0x120] sm:$0xff]
    %v813 = vld [vmem:[#allocation10 + $0x128] sm:$0xff]
    %v814 = vld [vmem:[#allocation10 + $0x130] sm:$0xff]
    %v815 = vld [vmem:[#allocation10 + $0x138] sm:$0xff]
    %v816 = vld [vmem:[#allocation10 + $0x140] sm:$0xff]
    %v817 = vld [vmem:[#allocation10 + $0x148] sm:$0xff]
    %v818 = vld [vmem:[#allocation10 + $0x150] sm:$0xff]
    %v819 = vld [vmem:[#allocation10 + $0x158] sm:$0xff]
    %v820 = vld [vmem:[#allocation10 + $0x160] sm:$0xff]
    %v821 = vld [vmem:[#allocation10 + $0x168] sm:$0xff]
    %v822 = vld [vmem:[#allocation10 + $0x170] sm:$0xff]
    %v823 = vld [vmem:[#allocation10 + $0x178] sm:$0xff]
    %s824 = scalar_lea.vmem %s5, 4
    %v825 = vld [vmem:[%s824] ss:$8 sm:$0x3]
    %v827 = vlaneseq
    %v828 = vshrl.u32 %v827, 7
    %v829 = vsub.s32 0, %v828
    %v830 = vrot.slane %v825, %v829
    %v831 = vlaneseq
    %v832 = vshrl.u32 %v831, 7
    %v833 = vsub.s32 1, %v832
    %v834 = vrot.slane %v825, %v833
    %v869 = vunpack.c.l.b16 %v792
    %v870 = vunpack.c.h.b16 %v792
    %v871 = vunpack.c.l.b16 %v793
    %v872 = vunpack.c.h.b16 %v793
    %v873 = vunpack.c.l.b16 %v794
    %v874 = vunpack.c.h.b16 %v794
    %v875 = vunpack.c.l.b16 %v795
    %v876 = vunpack.c.h.b16 %v795
    %v877 = vunpack.c.l.b16 %v796
    %v878 = vunpack.c.h.b16 %v796
    %v879 = vunpack.c.l.b16 %v797
    %v880 = vunpack.c.h.b16 %v797
    %v881 = vunpack.c.l.b16 %v798
    %v882 = vunpack.c.h.b16 %v798
    %v883 = vunpack.c.l.b16 %v799
    %v884 = vunpack.c.h.b16 %v799
    %v885 = vunpack.c.l.b16 %v800
    %v886 = vunpack.c.h.b16 %v800
    %v887 = vunpack.c.l.b16 %v801
    %v888 = vunpack.c.h.b16 %v801
    %v889 = vunpack.c.l.b16 %v802
    %v890 = vunpack.c.h.b16 %v802
    %v891 = vunpack.c.l.b16 %v803
    %v892 = vunpack.c.h.b16 %v803
    %v893 = vunpack.c.l.b16 %v804
    %v894 = vunpack.c.h.b16 %v804
    %v895 = vunpack.c.l.b16 %v805
    %v896 = vunpack.c.h.b16 %v805
    %v897 = vunpack.c.l.b16 %v806
    %v898 = vunpack.c.h.b16 %v806
    %v899 = vunpack.c.l.b16 %v807
    %v900 = vunpack.c.h.b16 %v807
    %v901 = vunpack.c.l.b16 %v808
    %v902 = vunpack.c.h.b16 %v808
    %v903 = vunpack.c.l.b16 %v809
    %v904 = vunpack.c.h.b16 %v809
    %v905 = vunpack.c.l.b16 %v810
    %v906 = vunpack.c.h.b16 %v810
    %v907 = vunpack.c.l.b16 %v811
    %v908 = vunpack.c.h.b16 %v811
    %v909 = vunpack.c.l.b16 %v812
    %v910 = vunpack.c.h.b16 %v812
    %v911 = vunpack.c.l.b16 %v813
    %v912 = vunpack.c.h.b16 %v813
    %v913 = vunpack.c.l.b16 %v814
    %v914 = vunpack.c.h.b16 %v814
    %v915 = vunpack.c.l.b16 %v815
    %v916 = vunpack.c.h.b16 %v815
    %v917 = vunpack.c.l.b16 %v816
    %v918 = vunpack.c.h.b16 %v816
    %v919 = vunpack.c.l.b16 %v817
    %v920 = vunpack.c.h.b16 %v817
    %v921 = vunpack.c.l.b16 %v818
    %v922 = vunpack.c.h.b16 %v818
    %v923 = vunpack.c.l.b16 %v819
    %v924 = vunpack.c.h.b16 %v819
    %v925 = vunpack.c.l.b16 %v820
    %v926 = vunpack.c.h.b16 %v820
    %v927 = vunpack.c.l.b16 %v821
    %v928 = vunpack.c.h.b16 %v821
    %v929 = vunpack.c.l.b16 %v822
    %v930 = vunpack.c.h.b16 %v822
    %v931 = vunpack.c.l.b16 %v823
    %v932 = vunpack.c.h.b16 %v823
    %v933 = vpack.c.b16 %v871, %v869
    %v934 = vpack.c.b16 %v872, %v870
    %v935 = vpack.c.b16 %v875, %v873
    %v936 = vpack.c.b16 %v876, %v874
    %v937 = vpack.c.b16 %v879, %v877
    %v938 = vpack.c.b16 %v880, %v878
    %v939 = vpack.c.b16 %v883, %v881
    %v940 = vpack.c.b16 %v884, %v882
    %v941 = vpack.c.b16 %v887, %v885
    %v942 = vpack.c.b16 %v888, %v886
    %v943 = vpack.c.b16 %v891, %v889
    %v944 = vpack.c.b16 %v892, %v890
    %v945 = vpack.c.b16 %v895, %v893
    %v946 = vpack.c.b16 %v896, %v894
    %v947 = vpack.c.b16 %v899, %v897
    %v948 = vpack.c.b16 %v900, %v898
    %v949 = vpack.c.b16 %v903, %v901
    %v950 = vpack.c.b16 %v904, %v902
    %v951 = vpack.c.b16 %v907, %v905
    %v952 = vpack.c.b16 %v908, %v906
    %v953 = vpack.c.b16 %v911, %v909
    %v954 = vpack.c.b16 %v912, %v910
    %v955 = vpack.c.b16 %v915, %v913
    %v956 = vpack.c.b16 %v916, %v914
    %v957 = vpack.c.b16 %v919, %v917
    %v958 = vpack.c.b16 %v920, %v918
    %v959 = vpack.c.b16 %v923, %v921
    %v960 = vpack.c.b16 %v924, %v922
    %v961 = vpack.c.b16 %v927, %v925
    %v962 = vpack.c.b16 %v928, %v926
    %v963 = vpack.c.b16 %v931, %v929
    %v964 = vpack.c.b16 %v932, %v930
    %997 = vmatprep.subr.bf16.mxu0 %v934
    %998 = vmatpush1.bf16.msra.mxu0 %v933
    %999 = vmatprep.subr.bf16.mxu0 %v936
    %1000 = vmatpush1.bf16.msra.mxu0 %v935
    %1001 = vmatprep.subr.bf16.mxu0 %v938
    %1002 = vmatpush1.bf16.msra.mxu0 %v937
    %1003 = vmatprep.subr.bf16.mxu0 %v940
    %1004 = vmatpush1.bf16.msra.mxu0 %v939
    %1005 = vmatprep.subr.bf16.mxu0 %v942
    %1006 = vmatpush1.bf16.msra.mxu0 %v941
    %1007 = vmatprep.subr.bf16.mxu0 %v944
    %1008 = vmatpush1.bf16.msra.mxu0 %v943
    %1009 = vmatprep.subr.bf16.mxu0 %v946
    %1010 = vmatpush1.bf16.msra.mxu0 %v945
    %1011 = vmatprep.subr.bf16.mxu0 %v948
    %1012 = vmatpush1.bf16.msra.mxu0 %v947
    %1013 = vmatprep.subr.bf16.mxu0 %v950
    %1014 = vmatpush1.bf16.msra.mxu0 %v949
    %1015 = vmatprep.subr.bf16.mxu0 %v952
    %1016 = vmatpush1.bf16.msra.mxu0 %v951
    %1017 = vmatprep.subr.bf16.mxu0 %v954
    %1018 = vmatpush1.bf16.msra.mxu0 %v953
    %1019 = vmatprep.subr.bf16.mxu0 %v956
    %1020 = vmatpush1.bf16.msra.mxu0 %v955
    %1021 = vmatprep.subr.bf16.mxu0 %v958
    %1022 = vmatpush1.bf16.msra.mxu0 %v957
    %1023 = vmatprep.subr.bf16.mxu0 %v960
    %1024 = vmatpush1.bf16.msra.mxu0 %v959
    %1025 = vmatprep.subr.bf16.mxu0 %v962
    %1026 = vmatpush1.bf16.msra.mxu0 %v961
    %1027 = vmatprep.subr.bf16.mxu0 %v964
    %1028 = vmatpush1.bf16.msra.mxu0 %v963
    %1029 = vmatprep.mubr.bf16.mxu0 %v791
    %1030 = vmatmul.mubr.bf16.gmra.mrb[0].mxu0 %v790
    %v1031 = vpop.f32.mrb[0].mxu0
    %v1032 = vadd.f32 %v830, %v1031
    %v1033 = vpop.f32.mrb[0].mxu0
    %v1034 = vadd.f32 %v834, %v1033
    %v1035 = vpop.f32.mrb[0].mxu0
    %v1036 = vpop.f32.mrb[0].mxu0
    %1037 = vdwg.mxu0
    %v1038 = vmax.f32 %v1032, 0.0
    %v1039 = vmax.f32 %v1034, 0.0
    %v1040 = vpack.c.bf16 %v1038, %v1038
    %v1041 = vpack.c.bf16 %v1039, %v1039
    %v1042 = vld [vmem:[#allocation8 + $0x44] sm:$0xf]
    %v1043 = vld [vmem:[#allocation8 + $0x48] sm:$0xf]
    %v1044 = vld [vmem:[#allocation8 + $0x4c] sm:$0xf]
    %v1045 = vld [vmem:[#allocation8 + $0x50] sm:$0xf]
    %v1046 = vld [vmem:[#allocation8 + $0x54] sm:$0xf]
    %v1047 = vld [vmem:[#allocation8 + $0x58] sm:$0xf]
    %v1048 = vld [vmem:[#allocation8 + $0x5c] sm:$0xf]
    %v1049 = vld [vmem:[#allocation8 + $0x60] sm:$0xf]
    %v1050 = vld [vmem:[#allocation8 + $0x64] sm:$0xf]
    %v1051 = vld [vmem:[#allocation8 + $0x68] sm:$0xf]
    %v1052 = vld [vmem:[#allocation8 + $0x6c] sm:$0xf]
    %v1053 = vld [vmem:[#allocation8 + $0x70] sm:$0xf]
    %v1054 = vld [vmem:[#allocation8 + $0x74] sm:$0xf]
    %v1055 = vld [vmem:[#allocation8 + $0x78] sm:$0xf]
    %v1056 = vld [vmem:[#allocation8 + $0x7c] sm:$0xf]
    %v1057 = vld [vmem:[#allocation8 + $0x80] sm:$0xf]
    %v1058 = vld [vmem:[#allocation8 + $0x84] sm:$0xf]
    %v1059 = vld [vmem:[#allocation8 + $0x88] sm:$0xf]
    %v1060 = vld [vmem:[#allocation8 + $0x8c] sm:$0xf]
    %v1061 = vld [vmem:[#allocation8 + $0x90] sm:$0xf]
    %v1062 = vld [vmem:[#allocation8 + $0x94] sm:$0xf]
    %v1063 = vld [vmem:[#allocation8 + $0x98] sm:$0xf]
    %v1064 = vld [vmem:[#allocation8 + $0x9c] sm:$0xf]
    %v1065 = vld [vmem:[#allocation8 + $0xa0] sm:$0xf]
    %v1066 = vld [vmem:[#allocation8 + $0xa4] sm:$0xf]
    %v1067 = vld [vmem:[#allocation8 + $0xa8] sm:$0xf]
    %v1068 = vld [vmem:[#allocation8 + $0xac] sm:$0xf]
    %v1069 = vld [vmem:[#allocation8 + $0xb0] sm:$0xf]
    %v1070 = vld [vmem:[#allocation8 + $0xb4] sm:$0xf]
    %v1071 = vld [vmem:[#allocation8 + $0xb8] sm:$0xf]
    %v1072 = vld [vmem:[#allocation8 + $0xbc] sm:$0xf]
    %v1073 = vld [vmem:[#allocation8 + $0xc0] sm:$0xf]
    %v1074 = vld [vmem:[%s5 + $0x5] ss:$0 sm:$0xff]
    %v1107 = vunpack.c.l.b16 %v1042
    %v1108 = vunpack.c.l.b16 %v1043
    %v1109 = vunpack.c.l.b16 %v1044
    %v1110 = vunpack.c.l.b16 %v1045
    %v1111 = vunpack.c.l.b16 %v1046
    %v1112 = vunpack.c.l.b16 %v1047
    %v1113 = vunpack.c.l.b16 %v1048
    %v1114 = vunpack.c.l.b16 %v1049
    %v1115 = vunpack.c.l.b16 %v1050
    %v1116 = vunpack.c.l.b16 %v1051
    %v1117 = vunpack.c.l.b16 %v1052
    %v1118 = vunpack.c.l.b16 %v1053
    %v1119 = vunpack.c.l.b16 %v1054
    %v1120 = vunpack.c.l.b16 %v1055
    %v1121 = vunpack.c.l.b16 %v1056
    %v1122 = vunpack.c.l.b16 %v1057
    %v1123 = vunpack.c.l.b16 %v1058
    %v1124 = vunpack.c.l.b16 %v1059
    %v1125 = vunpack.c.l.b16 %v1060
    %v1126 = vunpack.c.l.b16 %v1061
    %v1127 = vunpack.c.l.b16 %v1062
    %v1128 = vunpack.c.l.b16 %v1063
    %v1129 = vunpack.c.l.b16 %v1064
    %v1130 = vunpack.c.l.b16 %v1065
    %v1131 = vunpack.c.l.b16 %v1066
    %v1132 = vunpack.c.l.b16 %v1067
    %v1133 = vunpack.c.l.b16 %v1068
    %v1134 = vunpack.c.l.b16 %v1069
    %v1135 = vunpack.c.l.b16 %v1070
    %v1136 = vunpack.c.l.b16 %v1071
    %v1137 = vunpack.c.l.b16 %v1072
    %v1138 = vunpack.c.l.b16 %v1073
    %v1139 = vpack.c.b16 %v1108, %v1107
    %v1140 = vpack.c.b16 %v1110, %v1109
    %v1141 = vpack.c.b16 %v1112, %v1111
    %v1142 = vpack.c.b16 %v1114, %v1113
    %v1143 = vpack.c.b16 %v1116, %v1115
    %v1144 = vpack.c.b16 %v1118, %v1117
    %v1145 = vpack.c.b16 %v1120, %v1119
    %v1146 = vpack.c.b16 %v1122, %v1121
    %v1147 = vpack.c.b16 %v1124, %v1123
    %v1148 = vpack.c.b16 %v1126, %v1125
    %v1149 = vpack.c.b16 %v1128, %v1127
    %v1150 = vpack.c.b16 %v1130, %v1129
    %v1151 = vpack.c.b16 %v1132, %v1131
    %v1152 = vpack.c.b16 %v1134, %v1133
    %v1153 = vpack.c.b16 %v1136, %v1135
    %v1154 = vpack.c.b16 %v1138, %v1137
    %1171 = vmatprep.subr.bf16.mxu0 0
    %1172 = vmatpush1.bf16.msra.mxu0 %v1139
    %1173 = vmatprep.subr.bf16.mxu0 0
    %1174 = vmatpush1.bf16.msra.mxu0 %v1140
    %1175 = vmatprep.subr.bf16.mxu0 0
    %1176 = vmatpush1.bf16.msra.mxu0 %v1141
    %1177 = vmatprep.subr.bf16.mxu0 0
    %1178 = vmatpush1.bf16.msra.mxu0 %v1142
    %1179 = vmatprep.subr.bf16.mxu0 0
    %1180 = vmatpush1.bf16.msra.mxu0 %v1143
    %1181 = vmatprep.subr.bf16.mxu0 0
    %1182 = vmatpush1.bf16.msra.mxu0 %v1144
    %1183 = vmatprep.subr.bf16.mxu0 0
    %1184 = vmatpush1.bf16.msra.mxu0 %v1145
    %1185 = vmatprep.subr.bf16.mxu0 0
    %1186 = vmatpush1.bf16.msra.mxu0 %v1146
    %1187 = vmatprep.subr.bf16.mxu0 0
    %1188 = vmatpush1.bf16.msra.mxu0 %v1147
    %1189 = vmatprep.subr.bf16.mxu0 0
    %1190 = vmatpush1.bf16.msra.mxu0 %v1148
    %1191 = vmatprep.subr.bf16.mxu0 0
    %1192 = vmatpush1.bf16.msra.mxu0 %v1149
    %1193 = vmatprep.subr.bf16.mxu0 0
    %1194 = vmatpush1.bf16.msra.mxu0 %v1150
    %1195 = vmatprep.subr.bf16.mxu0 0
    %1196 = vmatpush1.bf16.msra.mxu0 %v1151
    %1197 = vmatprep.subr.bf16.mxu0 0
    %1198 = vmatpush1.bf16.msra.mxu0 %v1152
    %1199 = vmatprep.subr.bf16.mxu0 0
    %1200 = vmatpush1.bf16.msra.mxu0 %v1153
    %1201 = vmatprep.subr.bf16.mxu0 0
    %1202 = vmatpush1.bf16.msra.mxu0 %v1154
    %1203 = vmatprep.mubr.bf16.mxu0 %v1041
    %1204 = vmatmul.mubr.bf16.gmra.mrb[0].mxu0 %v1040
    %v1205 = vpop.f32.mrb[0].mxu0
    %v1206 = vadd.f32 %v1074, %v1205
    %v1207 = vpop.f32.mrb[0].mxu0
    %v1208 = vpop.f32.mrb[0].mxu0
    %v1209 = vpop.f32.mrb[0].mxu0
    %1210 = vdwg.mxu0
    %v1211 = vtanh.pop %v1206
    %v1212 = vmul.f32 %v1211, 2.0
    %1213 = vst [vmem:[#allocation11] sm:$0xff] %v1212
    // Predicated region
    $region46: #{tpu_custom_call.1} parent=1 // pred_check
      _
    $region47: #{tpu_custom_call.1} parent=1 // pred_check_branch
      %1215 = sbr.rel (0) target = $region49
    $region48: #{tpu_custom_call.1} parent=1 // pred_region
      %s1217 = ssub.s32 128, 128
      %1218 = vsyncadd [#allocation4], %s1217
      %s1220 = sshll.u32 [#allocation11], 4
      %s1221 = int_to_ptr.vmem [resolvable:$true] %s1220
      %1223 = dma.vmem_to_hbm [thread:$0]  %s1221, 128, %s6, [#allocation4]
    $region49: #{tpu_custom_call.1} parent=1 // pred_fallthru
      _
    // Predicated region
    $region50: #{tpu_custom_call.1} parent=1 // pred_check
      _
    $region51: #{tpu_custom_call.1} parent=1 // pred_check_branch
      %1225 = sbr.rel (0) target = $region53
    $region52: #{tpu_custom_call.1} parent=1 // pred_region
      %1226 = dma.done [#allocation4], 128
    $region53: #{tpu_custom_call.1} parent=1 // pred_fallthru
      _
    %1227 = vsyncpa [#allocation3], 1
    %1228 = vsyncpa [#allocation6], 1
    %1229 = vsyncpa [#allocation9], 1
    %1230 = vsyncpa [#allocation4], 1

</llo_original>
